<compile_context>
chip_gen: v7x
topology: tpu7x:2x2x1
jax: 0.10.0
libtpu: 0.0.40
codegen_flags: <defaults>
</compile_context>

<pallas_src>
import functools

import jax
import jax.numpy as jnp
from jax import lax
from jax.experimental import pallas as pl
from jax.experimental.pallas import tpu as pltpu


def _make_kernel(ignore_index: int, epsilon: float):
    def kernel(pred_ref, tgt_ref, known_ref, unknown_ref, sum_ref, cnt_ref):
        # Cast to f32 *after* the tile is in VMEM (cheap VPU op; keeps HBM
        # traffic at the native dtype width).
        pred = pred_ref[...].astype(jnp.float32)          # [TN, C]
        tgt = tgt_ref[...]                                 # [TN, 1] i32
        known = known_ref[...].astype(jnp.float32)         # [TN, 1]
        unknown = unknown_ref[...].astype(jnp.float32)     # [TN, 1]

        tn, n_cls = pred.shape

        # Gather the target logit with an iota-compare + masked lane reduce
        # (VPU/XLU work; no MXU involved).
        col_ids = lax.broadcasted_iota(jnp.int32, (tn, n_cls), 1)   # [TN, C]
        onehot = col_ids == tgt                                     # [TN, C] bool
        tgt_logit = jnp.sum(jnp.where(onehot, pred, 0.0),
                            axis=-1, keepdims=True)                 # [TN, 1]

        # Stable log-sum-exp (matches exp(x)/sum(exp(x)) to fp tolerance but
        # does not overflow for large logits).
        row_max = jnp.max(pred, axis=-1, keepdims=True)             # [TN, 1]
        log_z = jnp.log(jnp.sum(jnp.exp(pred - row_max),
                                axis=-1, keepdims=True)) + row_max  # [TN, 1]

        log_p = tgt_logit - log_z                                   # [TN, 1]
        p = jnp.exp(log_p)                                          # [TN, 1]

        valid = tgt != ignore_index                                 # [TN, 1] bool
        contrib = log_p * known + jnp.log(1.0 - p + epsilon) * unknown
        contrib = jnp.where(valid, contrib, 0.0)                    # padded/ignored -> 0

        total = jnp.sum(contrib)                                    # scalar
        count = jnp.sum(jnp.where(valid, 1.0, 0.0))                 # scalar

        # Lane-dense per-block partial outputs (splat scalar into the block).
        sum_ref[...] = jnp.broadcast_to(total, sum_ref.shape).astype(jnp.float32)
        cnt_ref[...] = jnp.broadcast_to(count, cnt_ref.shape).astype(jnp.float32)

    return kernel


def _round_up(x: int, m: int) -> int:
    return ((x + m - 1) // m) * m


def _choose_row_tile(n: int, c: int) -> int:
    # ~2 MiB of f32 per pred tile; with double-buffering plus the in-kernel
    # [TN, C] temporaries this stays comfortably under the 16-32 MiB scoped
    # VMEM defaults on v5e/v6e/v7x.
    budget = 2 * 1024 * 1024
    tile = budget // max(c * 4, 1)
    tile = max(8, min(256, (tile // 8) * 8))
    # Never pad far beyond the actual number of rows.
    return min(tile, _round_up(n, 8))


def cross_entropy_and_unlikelihood_loss(
    pred_values, target_values, known_labels, unknown_labels,
    ignore_index=-100, epsilon=1e-10, row_tile=None,
):
    """pred_values: [N, C] float; target_values: [N] int; known/unknown: [N] float -> scalar f32."""
    n, c = pred_values.shape
    if row_tile is None:
        row_tile = _choose_row_tile(n, c)
    row_tile = max(8, (row_tile // 8) * 8)

    n_pad = _round_up(n, row_tile)
    pad = n_pad - n
    num_blocks = n_pad // row_tile

    # Keep pred in its native dtype (no HBM upcast); pad rows with zeros and
    # mark them ignored so they contribute nothing and are not counted.
    pred = pred_values
    tgt = target_values.astype(jnp.int32)
    known = known_labels.astype(jnp.float32)
    unknown = unknown_labels.astype(jnp.float32)
    if pad:
        pred = jnp.pad(pred, ((0, pad), (0, 0)))
        tgt = jnp.pad(tgt, (0, pad), constant_values=ignore_index)
        known = jnp.pad(known, (0, pad))
        unknown = jnp.pad(unknown, (0, pad))
    tgt = tgt.reshape(n_pad, 1)
    known = known.reshape(n_pad, 1)
    unknown = unknown.reshape(n_pad, 1)

    out_sum, out_cnt = pl.pallas_call(
        _make_kernel(ignore_index, epsilon),
        out_shape=(
            jax.ShapeDtypeStruct((num_blocks, 8, 128), jnp.float32),
            jax.ShapeDtypeStruct((num_blocks, 8, 128), jnp.float32),
        ),
        grid=(num_blocks,),
        in_specs=[
            pl.BlockSpec((row_tile, c), lambda i: (i, 0)),   # pred    [TN, C]
            pl.BlockSpec((row_tile, 1), lambda i: (i, 0)),   # target  [TN, 1]
            pl.BlockSpec((row_tile, 1), lambda i: (i, 0)),   # known   [TN, 1]
            pl.BlockSpec((row_tile, 1), lambda i: (i, 0)),   # unknown [TN, 1]
        ],
        out_specs=(
            pl.BlockSpec((1, 8, 128), lambda i: (i, 0, 0)),  # partial loss sums
            pl.BlockSpec((1, 8, 128), lambda i: (i, 0, 0)),  # partial valid counts
        ),
        compiler_params=pltpu.CompilerParams(
            dimension_semantics=("parallel",),               # rows split across TCs (v7x)
            vmem_limit_bytes=32 * 1024 * 1024,
        ),
    )(pred, tgt, known, unknown)

    total = out_sum[:, 0, 0].sum()
    count = out_cnt[:, 0, 0].sum()
    # NOTE: if every row is ignored, count == 0 and this is NaN — same as the
    # PyTorch loop's divide-by-zero behavior.
    return -total / count


def _reference(pred, tgt, known, unknown, ignore_index=-100, epsilon=1e-10):
    """Pure-JAX reference mirroring the PyTorch loop."""
    loss = 0.0
    n = pred.shape[0]
    for i in range(pred.shape[0]):
        ci = int(tgt[i])
        if ci == ignore_index:
            n -= 1
            continue
        p = jnp.exp(pred[i, ci]) / jnp.exp(pred[i]).sum()
        loss = loss + jnp.log(p) * known[i] + jnp.log(1.0 - p + epsilon) * unknown[i]
    return -loss / n


if __name__ == "__main__":
    key = jax.random.PRNGKey(0)
    k1, k2, k3, k4, k5, k6, k7, k8 = jax.random.split(key, 8)

    # Test 1: single block (N rows fit one row tile).
    N, C = 8, 32
    pred = jax.random.normal(k1, (N, C), dtype=jnp.float32)
    tgt = jax.random.randint(k2, (N,), 0, C, dtype=jnp.int32)
    tgt = tgt.at[2].set(-100).at[5].set(-100)       # exercise ignore_index path
    known = jax.random.uniform(k3, (N,), dtype=jnp.float32)
    unknown = jax.random.uniform(k4, (N,), dtype=jnp.float32)

    loss = jax.block_until_ready(
        cross_entropy_and_unlikelihood_loss(pred, tgt, known, unknown))
    ref = _reference(pred, tgt, known, unknown)
    assert jnp.allclose(loss, ref, rtol=1e-5, atol=1e-5), (loss, ref)

    # Test 2: multiple grid blocks + row padding (N=10 with row_tile=8 -> 2 blocks).
    N2, C2 = 10, 32
    pred2 = jax.random.normal(k5, (N2, C2), dtype=jnp.float32)
    tgt2 = jax.random.randint(k6, (N2,), 0, C2, dtype=jnp.int32)
    tgt2 = tgt2.at[1].set(-100)
    known2 = jax.random.uniform(k7, (N2,), dtype=jnp.float32)
    unknown2 = jax.random.uniform(k8, (N2,), dtype=jnp.float32)

    loss2 = jax.block_until_ready(
        cross_entropy_and_unlikelihood_loss(pred2, tgt2, known2, unknown2, row_tile=8))
    ref2 = _reference(pred2, tgt2, known2, unknown2)
    assert jnp.allclose(loss2, ref2, rtol=1e-5, atol=1e-5), (loss2, ref2)

    print("KERNEL_OK")
</pallas_src>

<mosaic_0001>
module attributes {stable_mosaic.version = 11 : i64} {
  func.func @kernel(%arg0: i32, %arg1: memref<8x32xf32, #tpu.memory_space<vmem>>, %arg2: memref<8x1xi32, #tpu.memory_space<vmem>>, %arg3: memref<8x1xf32, #tpu.memory_space<vmem>>, %arg4: memref<8x1xf32, #tpu.memory_space<vmem>>, %arg5: memref<1x8x128xf32, #tpu.memory_space<vmem>>, %arg6: memref<1x8x128xf32, #tpu.memory_space<vmem>>) attributes {dimension_semantics = [#tpu.dimension_semantics<parallel>], iteration_bounds = array<i64: 1>, scalar_prefetch = 0 : i64, scratch_operands = 0 : i64, tpu.core_type = #tpu.core_type<tc>, window_params = [{transform_indices = @transform_0, window_bounds = array<i64: 8, 32>}, {transform_indices = @transform_1, window_bounds = array<i64: 8, 1>}, {transform_indices = @transform_2, window_bounds = array<i64: 8, 1>}, {transform_indices = @transform_3, window_bounds = array<i64: 8, 1>}, {transform_indices = @transform_4, window_bounds = array<i64: 1, 8, 128>}, {transform_indices = @transform_5, window_bounds = array<i64: 1, 8, 128>}]} {
    %c0 = arith.constant 0 : index
    %c0_0 = arith.constant 0 : index
    %0 = vector.load %arg1[%c0, %c0_0] : memref<8x32xf32, #tpu.memory_space<vmem>>, vector<8x32xf32>
    %c0_1 = arith.constant 0 : index
    %c0_2 = arith.constant 0 : index
    %1 = vector.load %arg2[%c0_1, %c0_2] : memref<8x1xi32, #tpu.memory_space<vmem>>, vector<8x1xi32>
    %c0_3 = arith.constant 0 : index
    %c0_4 = arith.constant 0 : index
    %2 = vector.load %arg3[%c0_3, %c0_4] : memref<8x1xf32, #tpu.memory_space<vmem>>, vector<8x1xf32>
    %c0_5 = arith.constant 0 : index
    %c0_6 = arith.constant 0 : index
    %3 = vector.load %arg4[%c0_5, %c0_6] : memref<8x1xf32, #tpu.memory_space<vmem>>, vector<8x1xf32>
    %4 = tpu.iota {dimensions = array<i32: 1>} : vector<8x32xi32>
    %5 = vector.broadcast %1 : vector<8x1xi32> to vector<8x32xi32>
    %6 = arith.cmpi eq, %4, %5 : vector<8x32xi32>
    %cst = arith.constant 0.000000e+00 : f32
    %7 = vector.broadcast %cst : f32 to vector<8x32xf32>
    %8 = arith.select %6, %0, %7 : vector<8x32xi1>, vector<8x32xf32>
    %cst_7 = arith.constant dense<0.000000e+00> : vector<8xf32>
    %9 = vector.multi_reduction <add>, %8, %cst_7 [1] : vector<8x32xf32> to vector<8xf32>
    %10 = vector.shape_cast %9 : vector<8xf32> to vector<8x1xf32>
    %cst_8 = arith.constant dense<0xFF800000> : vector<8xf32>
    %11 = vector.multi_reduction <maximumf>, %0, %cst_8 [1] : vector<8x32xf32> to vector<8xf32>
    %12 = vector.shape_cast %11 : vector<8xf32> to vector<8x1xf32>
    %13 = vector.broadcast %12 : vector<8x1xf32> to vector<8x32xf32>
    %14 = arith.subf %0, %13 : vector<8x32xf32>
    %15 = math.exp %14 : vector<8x32xf32>
    %cst_9 = arith.constant dense<0.000000e+00> : vector<8xf32>
    %16 = vector.multi_reduction <add>, %15, %cst_9 [1] : vector<8x32xf32> to vector<8xf32>
    %17 = vector.shape_cast %16 : vector<8xf32> to vector<8x1xf32>
    %18 = math.log %17 : vector<8x1xf32>
    %19 = arith.addf %18, %12 : vector<8x1xf32>
    %20 = arith.subf %10, %19 : vector<8x1xf32>
    %21 = math.exp %20 : vector<8x1xf32>
    %c-100_i32 = arith.constant -100 : i32
    %22 = vector.broadcast %c-100_i32 : i32 to vector<8x1xi32>
    %23 = arith.cmpi ne, %1, %22 : vector<8x1xi32>
    %24 = arith.mulf %20, %2 : vector<8x1xf32>
    %cst_10 = arith.constant 1.000000e+00 : f32
    %25 = vector.broadcast %cst_10 : f32 to vector<8x1xf32>
    %26 = arith.subf %25, %21 : vector<8x1xf32>
    %cst_11 = arith.constant 1.000000e-10 : f32
    %27 = vector.broadcast %cst_11 : f32 to vector<8x1xf32>
    %28 = arith.addf %26, %27 : vector<8x1xf32>
    %29 = math.log %28 : vector<8x1xf32>
    %30 = arith.mulf %29, %3 : vector<8x1xf32>
    %31 = arith.addf %24, %30 : vector<8x1xf32>
    %cst_12 = arith.constant 0.000000e+00 : f32
    %32 = vector.broadcast %cst_12 : f32 to vector<8x1xf32>
    %33 = arith.select %23, %31, %32 : vector<8x1xi1>, vector<8x1xf32>
    %34 = vector.shape_cast %33 : vector<8x1xf32> to vector<1x8x1xf32>
    %cst_13 = arith.constant dense<0.000000e+00> : vector<1xf32>
    %35 = vector.multi_reduction <add>, %34, %cst_13 [1, 2] : vector<1x8x1xf32> to vector<1xf32>
    %36 = vector.shape_cast %35 : vector<1xf32> to vector<1x1x1xf32>
    %37 = vector.extract %36[0, 0, 0] : f32 from vector<1x1x1xf32>
    %cst_14 = arith.constant 1.000000e+00 : f32
    %cst_15 = arith.constant 0.000000e+00 : f32
    %38 = vector.broadcast %cst_14 : f32 to vector<8x1xf32>
    %39 = vector.broadcast %cst_15 : f32 to vector<8x1xf32>
    %40 = arith.select %23, %38, %39 : vector<8x1xi1>, vector<8x1xf32>
    %41 = vector.shape_cast %40 : vector<8x1xf32> to vector<1x8x1xf32>
    %cst_16 = arith.constant dense<0.000000e+00> : vector<1xf32>
    %42 = vector.multi_reduction <add>, %41, %cst_16 [1, 2] : vector<1x8x1xf32> to vector<1xf32>
    %43 = vector.shape_cast %42 : vector<1xf32> to vector<1x1x1xf32>
    %44 = vector.extract %43[0, 0, 0] : f32 from vector<1x1x1xf32>
    %45 = vector.broadcast %37 : f32 to vector<1x8x128xf32>
    %c0_17 = arith.constant 0 : index
    %c0_18 = arith.constant 0 : index
    %c0_19 = arith.constant 0 : index
    %46 = vector.load %arg5[%c0_17, %c0_18, %c0_19] : memref<1x8x128xf32, #tpu.memory_space<vmem>>, vector<1x8x128xf32>
    tpu.vector_store %arg5[%c0_17, %c0_18, %c0_19], %45 {strides = array<i32>} : memref<1x8x128xf32, #tpu.memory_space<vmem>>, vector<1x8x128xf32>,
    %47 = vector.broadcast %44 : f32 to vector<1x8x128xf32>
    %c0_20 = arith.constant 0 : index
    %c0_21 = arith.constant 0 : index
    %c0_22 = arith.constant 0 : index
    %48 = vector.load %arg6[%c0_20, %c0_21, %c0_22] : memref<1x8x128xf32, #tpu.memory_space<vmem>>, vector<1x8x128xf32>
    tpu.vector_store %arg6[%c0_20, %c0_21, %c0_22], %47 {strides = array<i32>} : memref<1x8x128xf32, #tpu.memory_space<vmem>>, vector<1x8x128xf32>,
    return
  }
  func.func @transform_0(%arg0: i32) -> (i32, i32) {
    %c0_i32 = arith.constant 0 : i32
    %c0_i32_0 = arith.constant 0 : i32
    return %arg0, %c0_i32 : i32, i32
  }
  func.func @transform_1(%arg0: i32) -> (i32, i32) {
    %c0_i32 = arith.constant 0 : i32
    %c0_i32_0 = arith.constant 0 : i32
    return %arg0, %c0_i32 : i32, i32
  }
  func.func @transform_2(%arg0: i32) -> (i32, i32) {
    %c0_i32 = arith.constant 0 : i32
    %c0_i32_0 = arith.constant 0 : i32
    return %arg0, %c0_i32 : i32, i32
  }
  func.func @transform_3(%arg0: i32) -> (i32, i32) {
    %c0_i32 = arith.constant 0 : i32
    %c0_i32_0 = arith.constant 0 : i32
    return %arg0, %c0_i32 : i32, i32
  }
  func.func @transform_4(%arg0: i32) -> (i32, i32, i32) {
    %c0_i32 = arith.constant 0 : i32
    %c0_i32_0 = arith.constant 0 : i32
    %c0_i32_1 = arith.constant 0 : i32
    return %arg0, %c0_i32, %c0_i32_0 : i32, i32, i32
  }
  func.func @transform_5(%arg0: i32) -> (i32, i32, i32) {
    %c0_i32 = arith.constant 0 : i32
    %c0_i32_0 = arith.constant 0 : i32
    %c0_i32_1 = arith.constant 0 : i32
    return %arg0, %c0_i32, %c0_i32_0 : i32, i32, i32
  }
}

</mosaic_0001>

<llo_original>
// kernel: tpu_custom_call.1
$region0: #{tpu_custom_call.1}
  #allocation0 [shape = 'u32[]', space=smem, size = 0x4, offset = 0x4, fixed_abs, tag = 'smem constant byte address 0x4 - core index']
  #allocation1 [shape = 'u32[144,128]{1,0:T(1,128)}', space=vmem, size = 0x12000, scoped, tag = 'internal scratch']
  %s0 = inlined_call_operand.vmem [shape: f32[8,32], index: 0, kind: input, shape index: {}]
  %s1 = inlined_call_operand.vmem [shape: s32[8,1], index: 1, kind: input, shape index: {}]
  %s2 = inlined_call_operand.vmem [shape: f32[8,1], index: 2, kind: input, shape index: {}]
  %s3 = inlined_call_operand.vmem [shape: f32[8,1], index: 3, kind: input, shape index: {}]
  %s4 = inlined_call_operand.hbm [shape: f32[1,8,128], index: 4, kind: output, shape index: {0}]
  %s5 = inlined_call_operand.hbm [shape: f32[1,8,128], index: 5, kind: output, shape index: {1}]
  %6 = xla_tuple %s4, %s5
  %s7 = sld [smem:[#allocation0]]
  $region34: #{tpu_custom_call.1} parent=0
    _
  %s9 = ssub.s32 1, %s7
  %s10 = scalar_select 0, %s9, %s7
  $region1: #{tpu_custom_call.1} parent=0
    #allocation2 [shape = 'u8[4096]{0}', space=vmem, size = 0x1000, scoped, tag = 'output window, operand 0, single buffered']
    #allocation3 [shape = 's32[1]{0}', space=sflag, size = 0x4, scoped, tag = 'scoped memory for tpu_custom_call.1']
    #allocation4 [shape = 'u8[4096]{0}', space=vmem, size = 0x1000, scoped, tag = 'output window, operand 1, single buffered']
    #allocation5 [shape = 's32[1]{0}', space=sflag, size = 0x4, scoped, tag = 'scoped memory for tpu_custom_call.1']
    %11 = vsyncpa [#allocation3], 0
    %12 = vsyncpa [#allocation5], 0
    // Predicated region
    $region2: #{tpu_custom_call.1} parent=1 // pred_check
      _
    $region3: #{tpu_custom_call.1} parent=1 // pred_check_branch
      %14 = sbr.rel (0) target = $region5
    $region4: #{tpu_custom_call.1} parent=1 // pred_region
      _
    $region5: #{tpu_custom_call.1} parent=1 // pred_fallthru
      _
    // Predicated region
    $region6: #{tpu_custom_call.1} parent=1 // pred_check
      _
    $region7: #{tpu_custom_call.1} parent=1 // pred_check_branch
      %16 = sbr.rel (0) target = $region9
    $region8: #{tpu_custom_call.1} parent=1 // pred_region
      _
    $region9: #{tpu_custom_call.1} parent=1 // pred_fallthru
      _
    // Predicated region
    $region10: #{tpu_custom_call.1} parent=1 // pred_check
      _
    $region11: #{tpu_custom_call.1} parent=1 // pred_check_branch
      %18 = sbr.rel (0) target = $region13
    $region12: #{tpu_custom_call.1} parent=1 // pred_region
      _
    $region13: #{tpu_custom_call.1} parent=1 // pred_fallthru
      _
    // Predicated region
    $region14: #{tpu_custom_call.1} parent=1 // pred_check
      _
    $region15: #{tpu_custom_call.1} parent=1 // pred_check_branch
      %20 = sbr.rel (0) target = $region17
    $region16: #{tpu_custom_call.1} parent=1 // pred_region
      _
    $region17: #{tpu_custom_call.1} parent=1 // pred_fallthru
      _
    %v21 = vld [vmem:[%s0] sm:$0xff]
    %v22 = vld [vmem:[%s1] sm:$0xff]
    %v23 = vld [vmem:[%s2] sm:$0xff]
    %v24 = vld [vmem:[%s3] sm:$0xff]
    %v25 = vlaneseq
    %v26 = vand.u32 %v25, 127
    %27 = vset.pattern.permute.xlu0 0
    %28 = vperm.xlu0 %27, %v22
    %v29 = vpop.permute.xlu0 %28
    %vm30 = vcmp.eq.s32.totalorder %v26, %v29
    %v31 = vsel %vm30, %v21, 0.0
    %vm32 = vcmask 261120
    %v33 = vsel %vm32, %v31, 0.0
    %34 = vadd.xlane.f32.xlu0 %v33
    %v35 = vpop.xlane.xlu0 %34
    %v36 = vsel %vm32, %v21, -inf
    %37 = vmax.xlane.f32.xlu0 %v36
    %v38 = vpop.xlane.xlu0 %37
    %v39 = vsub.f32 %v21, %v38
    %v40 = vmul.f32 %v39, 1.442695
    %v41 = vpow.pop %v40
    %v42 = vsel %vm32, %v41, 0.0
    %43 = vadd.xlane.f32.xlu0 %v42
    %v44 = vpop.xlane.xlu0 %43
    %v45 = vlog2.pop %v44
    %v46 = vmul.f32 %v45, 0.6931472
    %v47 = vadd.f32 %v46, %v38
    %v48 = vsub.f32 %v35, %v47
    %v49 = vmul.f32 %v48, 1.442695
    %v50 = vpow.pop %v49
    %vm51 = vcmp.ne.s32.totalorder %v22, 4294967196
    %v52 = vmul.f32 %v48, %v23
    %v53 = vsub.f32 1.0, %v50
    %v54 = vadd.f32 %v53, 1e-10
    %v55 = vlog2.pop %v54
    %v56 = vmul.f32 %v55, 0.6931472
    %v57 = vmul.f32 %v56, %v24
    %v58 = vadd.f32 %v52, %v57
    %v59 = vsel %vm51, %v58, 0.0
    %vm60 = vcmask 7168
    %v61 = vsel %vm60, %v59, 0.0
    %62 = vadd.xlane.f32.xlu0 %v61
    %v63 = vpop.xlane.xlu0 %62
    %v64 = vrot.slane %v63, 4
    %v65 = vadd.f32 %v63, %v64
    %v66 = vrot.slane %v65, 2
    %v67 = vadd.f32 %v65, %v66
    %v68 = vrot.slane %v67, 1
    %v69 = vadd.f32 %v67, %v68
    %s70 = vtos %v69
    %v71 = vsel %vm51, 1.0, 0.0
    %v72 = vsel %vm60, %v71, 0.0
    %73 = vadd.xlane.f32.xlu0 %v72
    %v74 = vpop.xlane.xlu0 %73
    %v75 = vrot.slane %v74, 4
    %v76 = vadd.f32 %v74, %v75
    %v77 = vrot.slane %v76, 2
    %v78 = vadd.f32 %v76, %v77
    %v79 = vrot.slane %v78, 1
    %v80 = vadd.f32 %v78, %v79
    %s81 = vtos %v80
    %v82 = vstv %s70
    %83 = vst [vmem:[#allocation2] sm:$0xff] %v82
    %v84 = vstv %s81
    %85 = vst [vmem:[#allocation4] sm:$0xff] %v84
    // Predicated region
    $region18: #{tpu_custom_call.1} parent=1 // pred_check
      _
    $region19: #{tpu_custom_call.1} parent=1 // pred_check_branch
      %87 = sbr.rel (0) target = $region21
    $region20: #{tpu_custom_call.1} parent=1 // pred_region
      %s89 = ssub.s32 128, 128
      %90 = vsyncadd [#allocation3], %s89
      %s92 = sshll.u32 [#allocation2], 4
      %s93 = int_to_ptr.vmem [resolvable:$true] %s92
      %95 = dma.vmem_to_hbm [thread:$0]  %s93, 128, %s4, [#allocation3]
    $region21: #{tpu_custom_call.1} parent=1 // pred_fallthru
      _
    // Predicated region
    $region22: #{tpu_custom_call.1} parent=1 // pred_check
      _
    $region23: #{tpu_custom_call.1} parent=1 // pred_check_branch
      %97 = sbr.rel (0) target = $region25
    $region24: #{tpu_custom_call.1} parent=1 // pred_region
      %s99 = ssub.s32 128, 128
      %100 = vsyncadd [#allocation5], %s99
      %s102 = sshll.u32 [#allocation4], 4
      %s103 = int_to_ptr.vmem [resolvable:$true] %s102
      %105 = dma.vmem_to_hbm [thread:$0]  %s103, 128, %s5, [#allocation5]
    $region25: #{tpu_custom_call.1} parent=1 // pred_fallthru
      _
    // Predicated region
    $region26: #{tpu_custom_call.1} parent=1 // pred_check
      _
    $region27: #{tpu_custom_call.1} parent=1 // pred_check_branch
      %107 = sbr.rel (0) target = $region29
    $region28: #{tpu_custom_call.1} parent=1 // pred_region
      %108 = dma.done [#allocation3], 128
    $region29: #{tpu_custom_call.1} parent=1 // pred_fallthru
      _
    // Predicated region
    $region30: #{tpu_custom_call.1} parent=1 // pred_check
      _
    $region31: #{tpu_custom_call.1} parent=1 // pred_check_branch
      %110 = sbr.rel (0) target = $region33
    $region32: #{tpu_custom_call.1} parent=1 // pred_region
      %111 = dma.done [#allocation5], 128
    $region33: #{tpu_custom_call.1} parent=1 // pred_fallthru
      _
    %112 = vsyncpa [#allocation3], 1
    %113 = vsyncpa [#allocation5], 1

</llo_original>
